<compile_context>
chip_gen: v7x
topology: tpu7x:2x2x1
jax: 0.10.0
libtpu: 0.0.40
codegen_flags: <defaults>
</compile_context>

<pallas_src>
import jax
import jax.numpy as jnp
from jax.experimental import pallas as pl
from jax.experimental.pallas import tpu as pltpu


# ---------------------------------------------------------------------------
# Pallas kernel: one folded conv-as-matmul + one folded residual add
# ---------------------------------------------------------------------------
def fused_conv_add_kernel(p_ref, w_ref, r_ref, o_ref):
    acc = jnp.dot(p_ref[...], w_ref[...], preferred_element_type=jnp.float32)
    o_ref[...] = (acc + r_ref[...]).astype(o_ref.dtype)


def _round_up(x, m):
    return (x + m - 1) // m * m


def _im2col_nhwc(x_nhwc, kh, kw, pad_h, pad_w):
    """(kh, kw) patches, 'same' zero padding (odd kernels), stride 1.

    Returns (N*H*W, kh*kw*Cin); patch flat order is (kh, kw, Cin) to match a
    PyTorch weight transposed to (kh, kw, Cin, Cout).
    """
    N, H, W, Cin = x_nhwc.shape
    xp = jnp.pad(x_nhwc, ((0, 0), (pad_h, pad_h), (pad_w, pad_w), (0, 0)))
    cols = []
    for dy in range(kh):
        for dx in range(kw):
            cols.append(xp[:, dy:dy + H, dx:dx + W, :])          # (N,H,W,Cin)
    patches = jnp.concatenate(cols, axis=-1)                     # (N,H,W,kh*kw*Cin)
    return patches.reshape(N * H * W, kh * kw * Cin)


def model_forward(x_nchw, w1, b1, w2, b2, inp1_nchw, inp2_nchw, *, tm=1024):
    """x_nchw: (N, Cin, H, W); w: (Cout, Cin, kh, kw) (PyTorch layout).

    tm: requested M tile in *pixels* (converted to grouped rows internally,
    forced to a multiple of 8 and capped by a VMEM budget).
    """
    N, Cin, H, W = x_nchw.shape
    Cout, _, kh, kw = w1.shape
    # 'same' padding, stride 1, odd kernel sizes; H/W padded independently.
    pad_h, pad_w = kh // 2, kw // 2

    LANE, SUB = 128, 8

    # ---- glue (plain JAX): NCHW -> NHWC, im2col ----
    x_nhwc = jnp.transpose(x_nchw, (0, 2, 3, 1))
    patches = _im2col_nhwc(x_nhwc, kh, kw, pad_h, pad_w)         # (M, Kdim)
    M, Kdim = patches.shape

    # ---- pixel grouping: pack g output pixels per lane row so residual and
    #      output streams carry zero channel padding (Cout=8 would otherwise
    #      be 15/16 zero bytes at the HBM roofline).
    if Cout < LANE and LANE % Cout == 0:
        g = LANE // Cout
    else:
        g = 1                                                   # fallback: pad Cout up
    Kp = _round_up(Kdim, SUB)          # per-pixel contraction, sublane aligned
    Kg = g * Kp                        # grouped contraction dim
    Cg = g * Cout                      # grouped live output lanes
    Cp = _round_up(Cg, LANE)           # padded lane width (== Cg when g > 1)

    # ---- grouped-M tiling: TMg is a multiple of 8 by construction ----
    Mg_raw = -(-M // g)
    Mg8 = _round_up(Mg_raw, SUB)
    TMg = min(max(SUB, _round_up(tm, SUB * g) // g), Mg8)
    # prefer >= 4 grid steps when there is enough work (pipelining; also lets
    # v7x's 2 TensorCores both get >= 2 steps each).
    if Mg8 // TMg < 4 and Mg8 >= 4 * SUB:
        TMg = max(SUB, _round_up(Mg8 // 4, SUB))

    # VMEM guard: double-buffered lhs/res/out tiles + weight, keep << 12 MiB so
    # the pipeline fits v5e's 16 MiB scoped default (and v7x's 32 MiB default).
    def _vmem_bytes(t):
        return 4 * (2 * t * Kg + 4 * t * Cp + 2 * Kg * Cp)

    while TMg > SUB and _vmem_bytes(TMg) > 12 * 2**20:
        TMg = max(SUB, _round_up(TMg // 2, SUB))

    Mg = _round_up(Mg8, TMg)
    Mp = Mg * g
    grid = (Mg // TMg,)

    # ---- fold the two convs: P@w1 + P@w2 == P@(w1+w2).  (f32 rounding differs
    #      negligibly from two separate dots; fine at 1e-4 tolerance.)
    #      Build a g-block-diagonal weight so one dot emits g pixels per
    #      lane-dense output row:  out_g[r, j*Cout+c] == out[r*g+j, c].
    wm = jnp.transpose(w1 + w2, (2, 3, 1, 0)).reshape(Kdim, Cout)   # (kh,kw,Cin,Cout)
    wm = jnp.pad(wm, ((0, Kp - Kdim), (0, 0)))                      # (Kp, Cout)
    w_bd = jnp.einsum("gh,kc->gkhc", jnp.eye(g, dtype=wm.dtype), wm)
    w_bd = w_bd.reshape(Kg, Cg)
    w_bd = jnp.pad(w_bd, ((0, 0), (0, Cp - Cg)))                    # (Kg, Cp)

    # ---- fold bias + BOTH residuals into ONE stream (single HBM read) ----
    res = jnp.broadcast_to(inp1_nchw + inp2_nchw, (N, Cout, H, W))
    res = jnp.transpose(res, (0, 2, 3, 1)).reshape(M, Cout) + (b1 + b2)[None, :]
    res = jnp.pad(res, ((0, Mp - M), (0, 0))).reshape(Mg, Cg)
    res = jnp.pad(res, ((0, 0), (0, Cp - Cg)))                      # (Mg, Cp)

    # ---- LHS: pad K to Kp and M to Mp, then group g pixels per row ----
    lhs = jnp.pad(patches, ((0, Mp - M), (0, Kp - Kdim))).reshape(Mg, Kg)

    cost = pl.CostEstimate(
        flops=2 * Mg * Kg * Cp,
        transcendentals=0,
        bytes_accessed=4 * (Mg * Kg + Kg * Cp + 2 * Mg * Cp))

    # ---- hot path: pipelined, grouped-M-tiled Pallas kernel ----
    out_g = pl.pallas_call(
        fused_conv_add_kernel,
        out_shape=jax.ShapeDtypeStruct((Mg, Cp), jnp.float32),
        grid=grid,
        in_specs=[
            pl.BlockSpec((TMg, Kg), lambda i: (i, 0)),   # grouped im2col LHS
            pl.BlockSpec((Kg, Cp), lambda i: (0, 0)),    # folded weight (resident)
            pl.BlockSpec((TMg, Cp), lambda i: (i, 0)),   # bias + both residuals
        ],
        out_specs=pl.BlockSpec((TMg, Cp), lambda i: (i, 0)),
        compiler_params=pltpu.CompilerParams(
            dimension_semantics=("parallel",)),          # shard M over v7x TCs
        cost_estimate=cost,
    )(lhs, w_bd, res)

    # ---- glue: un-group, un-pad, back to NCHW ----
    out = out_g[:, :Cg].reshape(Mp, Cout)[:M]
    out = out.reshape(N, H, W, Cout)
    return jnp.transpose(out, (0, 3, 1, 2))


# ---------------------------------------------------------------------------
# Pure-JAX reference for a sanity check
# ---------------------------------------------------------------------------
def reference_forward(x, w1, b1, w2, b2, inp1, inp2):
    def conv(x, w, b):
        y = jax.lax.conv_general_dilated(
            x, w, window_strides=(1, 1), padding="SAME",
            dimension_numbers=("NCHW", "OIHW", "NCHW"))
        return y + b.reshape(1, -1, 1, 1)
    v3 = conv(x, w1, b1) + conv(x, w2, b2)
    return v3 + inp1 + inp2


if __name__ == "__main__":
    # Small shapes consistent with the module (orig: x = (1, 3, 64, 64))
    N, Cin, H, W = 2, 4, 16, 16
    Cout, kh, kw = 8, 3, 3

    key = jax.random.PRNGKey(0)
    kx, k1, k2, kb1, kb2, ki1, ki2 = jax.random.split(key, 7)

    x = jax.random.normal(kx, (N, Cin, H, W), dtype=jnp.float32)
    # Deterministic "Conv2d" params (PyTorch layout: (Cout, Cin, kh, kw))
    fan_in = Cin * kh * kw
    bound = 1.0 / jnp.sqrt(fan_in)
    w1 = jax.random.uniform(k1, (Cout, Cin, kh, kw), jnp.float32, -bound, bound)
    w2 = jax.random.uniform(k2, (Cout, Cin, kh, kw), jnp.float32, -bound, bound)
    b1 = jax.random.uniform(kb1, (Cout,), jnp.float32, -bound, bound)
    b2 = jax.random.uniform(kb2, (Cout,), jnp.float32, -bound, bound)

    inp1 = jax.random.normal(ki1, (N, Cout, H, W), dtype=jnp.float32)
    inp2 = jax.random.normal(ki2, (N, Cout, H, W), dtype=jnp.float32)

    out = model_forward(x, w1, b1, w2, b2, inp1, inp2)
    out = jax.block_until_ready(out)

    ref = reference_forward(x, w1, b1, w2, b2, inp1, inp2)
    assert out.shape == (N, Cout, H, W)
    assert jnp.allclose(out, ref, atol=1e-4, rtol=1e-4)

    print("KERNEL_OK")
</pallas_src>

<mosaic_0001>
module attributes {stable_mosaic.version = 11 : i64} {
  func.func @fused_conv_add_kernel(%arg0: i32, %arg1: memref<8x640xf32, #tpu.memory_space<vmem>>, %arg2: memref<640x128xf32, #tpu.memory_space<vmem>>, %arg3: memref<8x128xf32, #tpu.memory_space<vmem>>, %arg4: memref<8x128xf32, #tpu.memory_space<vmem>>) attributes {dimension_semantics = [#tpu.dimension_semantics<parallel>], iteration_bounds = array<i64: 4>, scalar_prefetch = 0 : i64, scratch_operands = 0 : i64, tpu.core_type = #tpu.core_type<tc>, window_params = [{transform_indices = @transform_0, window_bounds = array<i64: 8, 640>}, {pipeline_mode = #tpu.pipeline_mode<synchronous>, transform_indices = @transform_1, window_bounds = array<i64: 640, 128>}, {transform_indices = @transform_2, window_bounds = array<i64: 8, 128>}, {transform_indices = @transform_3, window_bounds = array<i64: 8, 128>}]} {
    %c0 = arith.constant 0 : index
    %c0_0 = arith.constant 0 : index
    %0 = vector.load %arg1[%c0, %c0_0] : memref<8x640xf32, #tpu.memory_space<vmem>>, vector<8x640xf32>
    %c0_1 = arith.constant 0 : index
    %c0_2 = arith.constant 0 : index
    %1 = vector.load %arg2[%c0_1, %c0_2] : memref<640x128xf32, #tpu.memory_space<vmem>>, vector<640x128xf32>
    %cst = arith.constant dense<0.000000e+00> : vector<8x128xf32>
    %2 = tpu.matmul %0, %1, %cst {dimension_numbers = #tpu.dot_dimension_numbers<[1], [0], [0], [1], [0, 0, 1, 1], [], []>} : vector<8x640xf32>, vector<640x128xf32>, vector<8x128xf32> -> vector<8x128xf32>
    %c0_3 = arith.constant 0 : index
    %c0_4 = arith.constant 0 : index
    %3 = vector.load %arg3[%c0_3, %c0_4] : memref<8x128xf32, #tpu.memory_space<vmem>>, vector<8x128xf32>
    %4 = arith.addf %2, %3 : vector<8x128xf32>
    %c0_5 = arith.constant 0 : index
    %c0_6 = arith.constant 0 : index
    %5 = vector.load %arg4[%c0_5, %c0_6] : memref<8x128xf32, #tpu.memory_space<vmem>>, vector<8x128xf32>
    tpu.vector_store %arg4[%c0_5, %c0_6], %4 {strides = array<i32>} : memref<8x128xf32, #tpu.memory_space<vmem>>, vector<8x128xf32>,
    return
  }
  func.func @transform_0(%arg0: i32) -> (i32, i32) {
    %c0_i32 = arith.constant 0 : i32
    %c0_i32_0 = arith.constant 0 : i32
    return %arg0, %c0_i32 : i32, i32
  }
  func.func @transform_1(%arg0: i32) -> (i32, i32) {
    %c0_i32 = arith.constant 0 : i32
    %c0_i32_0 = arith.constant 0 : i32
    %c0_i32_1 = arith.constant 0 : i32
    return %c0_i32, %c0_i32_0 : i32, i32
  }
  func.func @transform_2(%arg0: i32) -> (i32, i32) {
    %c0_i32 = arith.constant 0 : i32
    %c0_i32_0 = arith.constant 0 : i32
    return %arg0, %c0_i32 : i32, i32
  }
  func.func @transform_3(%arg0: i32) -> (i32, i32) {
    %c0_i32 = arith.constant 0 : i32
    %c0_i32_0 = arith.constant 0 : i32
    return %arg0, %c0_i32 : i32, i32
  }
}

</mosaic_0001>

<llo_original>
// kernel: tpu_custom_call.1
$region0: #{tpu_custom_call.1}
  #allocation0 [shape = 'u32[]', space=smem, size = 0x4, offset = 0x4, fixed_abs, tag = 'smem constant byte address 0x4 - core index']
  #allocation1 [shape = 'u32[144,128]{1,0:T(1,128)}', space=vmem, size = 0x12000, scoped, tag = 'internal scratch']
  %s0 = inlined_call_operand.hbm [shape: f32[32,640], index: 0, kind: input, shape index: {}]
  %s1 = inlined_call_operand.hbm [shape: f32[640,128], index: 1, kind: input, shape index: {}]
  %s2 = inlined_call_operand.hbm [shape: f32[32,128], index: 2, kind: input, shape index: {}]
  %s3 = inlined_call_operand.hbm [shape: f32[32,128], index: 3, kind: output, shape index: {}]
  %s4 = sld [smem:[#allocation0]]
  $region57: #{tpu_custom_call.1} parent=0
    _
  %s6 = ssub.s32 1, %s4
  %s7 = scalar_select 0, %s6, %s4
  $region1: #{tpu_custom_call.1} parent=0
    #allocation2 [shape = 'u8[40960]{0}', space=vmem, size = 0xa000, scoped, tag = 'input window, operand 0']
    #allocation3 [shape = 's32[2]{0}', space=sflag, size = 0x8, scoped, tag = 'scoped memory for tpu_custom_call.1']
    #allocation4 [shape = 's32[2]{0}', space=sflag, size = 0x8, scoped, tag = 'scoped memory for tpu_custom_call.1']
    #allocation5 [shape = 'u8[327680]{0}', space=vmem, size = 0x50000, scoped, tag = 'input window, operand 1, single buffered']
    #allocation6 [shape = 's32[1]{0}', space=sflag, size = 0x4, scoped, tag = 'scoped memory for tpu_custom_call.1']
    #allocation7 [shape = 'u8[8192]{0}', space=vmem, size = 0x2000, scoped, tag = 'input window, operand 2']
    #allocation8 [shape = 'u8[8192]{0}', space=vmem, size = 0x2000, scoped, tag = 'output window, operand 0']
    %8 = vsyncpa [#allocation3], 0
    %s9 = scalar_lea.sflag [#allocation3], 1
    %10 = vsyncpa %s9, 0
    %11 = vsyncpa [#allocation6], 0
    %12 = vsyncpa [#allocation4], 0
    %s13 = scalar_lea.sflag [#allocation4], 1
    %14 = vsyncpa %s13, 0
    loop: start=0, step=1, limit=6
    $region2: #{tpu_custom_call.1} parent=1 // loop_pre_header
      _
    $region3: #{tpu_custom_call.1} parent=1 // loop_header
      %s16 = sphi 0, %s20
      %p17 = scmp.ge.s32.totalorder %s16, 6
      %s26 = sphi 0, %s28
      %s29 = sphi 0, %s26
      %s30 = sphi 0, %s29
      %s46 = sphi 0, %s30
      %s50 = sphi 0, %s50
      %s52 = sphi 0, %s50
      %s53 = sphi 0, %s52
      %s67 = sphi 0, %s53
      %s73 = sphi 0, %s75
      %s76 = sphi 0, %s73
      %s77 = sphi 0, %s76
      %s93 = sphi 0, %s77
      %s99 = sphi 0, %s101
      %s102 = sphi 0, %s99
      %s103 = sphi 0, %s102
      %s119 = sphi 0, %s103
    $region4: #{tpu_custom_call.1} parent=1 // loop_header_branch
      %19 = sbr.rel (%p17) target = $region8
    $region5: #{tpu_custom_call.1} parent=1 // loop_body
      %s21 = ssub.s32 %s16, 1
      %s22 = ssub.s32 %s16, 2
      %s23 = sadd.s32 %s16, 1
      %s24 = ssub.s32 %s16, %s23
      %p25 = scmp.eq.s32.totalorder %s24, 0
      %s27 = sadd.s32 %s26, 1
      %s28 = scalar_select %p25, %s26, %s27
      %p31 = pneg %p25
      %p32 = scmp.eq.s32.totalorder %s16, 3
      %p33 = por %p31, %p32
      %p34 = scmp.ne.s32.totalorder %s26, %s29
      %p35 = scmp.eq.s32.totalorder %s16, 0
      %p36 = por %p34, %p35
      %p37 = scmp.ne.s32.totalorder %s26, %s29
      %p38 = scmp.eq.s32.totalorder %s21, 3
      %p39 = por %p37, %p38
      %p40 = scmp.ne.s32.totalorder %s29, %s30
      %p41 = scmp.eq.s32.totalorder %s21, 0
      %p42 = por %p40, %p41
      %p43 = scmp.ne.s32.totalorder %s29, %s30
      %p44 = scmp.eq.s32.totalorder %s22, 3
      %p45 = por %p43, %p44
      %p47 = scmp.ne.s32.totalorder %s30, %s46
      %p48 = scmp.eq.s32.totalorder %s22, 0
      %p49 = por %p47, %p48
      %s51 = sadd.s32 %s50, 1
      %p54 = scmp.eq.s32.totalorder %s16, 3
      %p55 = scmp.ne.s32.totalorder %s50, %s52
      %p56 = scmp.eq.s32.totalorder %s16, 0
      %p57 = por %p55, %p56
      %p58 = scmp.ne.s32.totalorder %s50, %s52
      %p59 = scmp.eq.s32.totalorder %s21, 3
      %p60 = por %p58, %p59
      %p61 = scmp.ne.s32.totalorder %s52, %s53
      %p62 = scmp.eq.s32.totalorder %s21, 0
      %p63 = por %p61, %p62
      %p64 = scmp.ne.s32.totalorder %s52, %s53
      %p65 = scmp.eq.s32.totalorder %s22, 3
      %p66 = por %p64, %p65
      %p68 = scmp.ne.s32.totalorder %s53, %s67
      %p69 = scmp.eq.s32.totalorder %s22, 0
      %p70 = por %p68, %p69
      %s71 = ssub.s32 %s16, %s23
      %p72 = scmp.eq.s32.totalorder %s71, 0
      %s74 = sadd.s32 %s73, 1
      %s75 = scalar_select %p72, %s73, %s74
      %p78 = pneg %p72
      %p79 = scmp.eq.s32.totalorder %s16, 3
      %p80 = por %p78, %p79
      %p81 = scmp.ne.s32.totalorder %s73, %s76
      %p82 = scmp.eq.s32.totalorder %s16, 0
      %p83 = por %p81, %p82
      %p84 = scmp.ne.s32.totalorder %s73, %s76
      %p85 = scmp.eq.s32.totalorder %s21, 3
      %p86 = por %p84, %p85
      %p87 = scmp.ne.s32.totalorder %s76, %s77
      %p88 = scmp.eq.s32.totalorder %s21, 0
      %p89 = por %p87, %p88
      %p90 = scmp.ne.s32.totalorder %s76, %s77
      %p91 = scmp.eq.s32.totalorder %s22, 3
      %p92 = por %p90, %p91
      %p94 = scmp.ne.s32.totalorder %s77, %s93
      %p95 = scmp.eq.s32.totalorder %s22, 0
      %p96 = por %p94, %p95
      %s97 = ssub.s32 %s16, %s23
      %p98 = scmp.eq.s32.totalorder %s97, 0
      %s100 = sadd.s32 %s99, 1
      %s101 = scalar_select %p98, %s99, %s100
      %p104 = pneg %p98
      %p105 = scmp.eq.s32.totalorder %s16, 3
      %p106 = por %p104, %p105
      %p107 = scmp.ne.s32.totalorder %s99, %s102
      %p108 = scmp.eq.s32.totalorder %s16, 0
      %p109 = por %p107, %p108
      %p110 = scmp.ne.s32.totalorder %s99, %s102
      %p111 = scmp.eq.s32.totalorder %s21, 3
      %p112 = por %p110, %p111
      %p113 = scmp.ne.s32.totalorder %s102, %s103
      %p114 = scmp.eq.s32.totalorder %s21, 0
      %p115 = por %p113, %p114
      %p116 = scmp.ne.s32.totalorder %s102, %s103
      %p117 = scmp.eq.s32.totalorder %s22, 3
      %p118 = por %p116, %p117
      %p120 = scmp.ne.s32.totalorder %s103, %s119
      %p121 = scmp.eq.s32.totalorder %s22, 0
      %p122 = por %p120, %p121
      %p123 = scmp.le.s32.totalorder 1, %s16
      %p124 = scmp.lt.s32.totalorder %s16, 5
      %p125 = pnand %p123, %p124
      %p126 = pneg %p125
      // Predicated region
      $region9: #{tpu_custom_call.1} parent=5 // pred_check
        _
      $region10: #{tpu_custom_call.1} parent=5 // pred_check_branch
        %128 = sbr.rel (%p125) target = $region12
      $region11: #{tpu_custom_call.1} parent=5 // pred_region
        %s129 = ssub.s32 %s16, 1
        // Predicated region
        $region13: #{tpu_custom_call.1} parent=11 // pred_check
          %p130 = pneg %p63
        $region14: #{tpu_custom_call.1} parent=11 // pred_check_branch
          %132 = sbr.rel (%p130) target = $region16
        $region15: #{tpu_custom_call.1} parent=11 // pred_region
          %s134 = ssub.s32 10240, 10240
          %135 = vsyncadd [#allocation6], %s134
          %s136 = sshll.u32 [#allocation5], 4
          %s137 = int_to_ptr.vmem [resolvable:$true] %s136
          %142 = dma.hbm_to_vmem [thread:$0]  %s1, 10240, %s137, [#allocation6], 128, 128, 8
        $region16: #{tpu_custom_call.1} parent=11 // pred_fallthru
          _
      $region12: #{tpu_custom_call.1} parent=5 // pred_fallthru
        _
      %p143 = scmp.lt.s32.totalorder %s16, 4
      // Predicated region
      $region17: #{tpu_custom_call.1} parent=5 // pred_check
        %p144 = pneg %p143
      $region18: #{tpu_custom_call.1} parent=5 // pred_check_branch
        %146 = sbr.rel (%p144) target = $region20
      $region19: #{tpu_custom_call.1} parent=5 // pred_region
        // Predicated region
        $region21: #{tpu_custom_call.1} parent=19 // pred_check
          %p147 = pneg %p36
        $region22: #{tpu_custom_call.1} parent=19 // pred_check_branch
          %149 = sbr.rel (%p147) target = $region24
        $region23: #{tpu_custom_call.1} parent=19 // pred_region
          %s150 = sand.u32 %s16, 1
          %s151 = scalar_lea.sflag [#allocation3], %s150
          %s152 = sand.u32 %s26, 1
          %s153 = smul.addr %s152, 40
          %s154 = scalar_lea.vmem [#allocation2], %s153
          %s156 = ssub.s32 640, 640
          %157 = vsyncadd %s151, %s156
          %s158 = smul.addr %s16, 5
          %s159 = smul.addr %s158, 128
          %s160 = scalar_lea.hbm %s0, %s159
          %s162 = sshll.u32 %s154, 4
          %s163 = int_to_ptr.vmem [resolvable:$true] %s162
          %165 = dma.hbm_to_vmem [thread:$0]  %s160, 640, %s163, %s151
        $region24: #{tpu_custom_call.1} parent=19 // pred_fallthru
          _
        // Predicated region
        $region25: #{tpu_custom_call.1} parent=19 // pred_check
          %p166 = pneg %p83
        $region26: #{tpu_custom_call.1} parent=19 // pred_check_branch
          %168 = sbr.rel (%p166) target = $region28
        $region27: #{tpu_custom_call.1} parent=19 // pred_region
          %s169 = sand.u32 %s16, 1
          %s170 = scalar_lea.sflag [#allocation3], %s169
          %s171 = sand.u32 %s73, 1
          %s172 = smul.addr %s171, 8
          %s173 = scalar_lea.vmem [#allocation7], %s172
          %s175 = ssub.s32 128, 128
          %176 = vsyncadd %s170, %s175
          %s177 = smul.addr %s16, 128
          %s178 = scalar_lea.hbm %s2, %s177
          %s180 = sshll.u32 %s173, 4
          %s181 = int_to_ptr.vmem [resolvable:$true] %s180
          %183 = dma.hbm_to_vmem [thread:$0]  %s178, 128, %s181, %s170
        $region28: #{tpu_custom_call.1} parent=19 // pred_fallthru
          _
      $region20: #{tpu_custom_call.1} parent=5 // pred_fallthru
        _
      %p184 = scmp.le.s32.totalorder 1, %s16
      %p185 = scmp.lt.s32.totalorder %s16, 5
      %p186 = pnand %p184, %p185
      %p187 = pneg %p186
      // Predicated region
      $region29: #{tpu_custom_call.1} parent=5 // pred_check
        _
      $region30: #{tpu_custom_call.1} parent=5 // pred_check_branch
        %189 = sbr.rel (%p186) target = $region32
      $region31: #{tpu_custom_call.1} parent=5 // pred_region
        %s190 = ssub.s32 %s16, 1
        %s191 = sand.u32 %s21, 1
        %s192 = scalar_lea.sflag [#allocation3], %s191
        %s193 = sand.u32 %s29, 1
        %s194 = smul.addr %s193, 40
        %s195 = scalar_lea.vmem [#allocation2], %s194
        // Predicated region
        $region33: #{tpu_custom_call.1} parent=31 // pred_check
          %p196 = pneg %p42
        $region34: #{tpu_custom_call.1} parent=31 // pred_check_branch
          %198 = sbr.rel (%p196) target = $region36
        $region35: #{tpu_custom_call.1} parent=31 // pred_region
          %199 = dma.done %s192, 640
        $region36: #{tpu_custom_call.1} parent=31 // pred_fallthru
          _
        // Predicated region
        $region37: #{tpu_custom_call.1} parent=31 // pred_check
          %p200 = pneg %p63
        $region38: #{tpu_custom_call.1} parent=31 // pred_check_branch
          %202 = sbr.rel (%p200) target = $region40
        $region39: #{tpu_custom_call.1} parent=31 // pred_region
          %203 = dma.done [#allocation6], 10240
        $region40: #{tpu_custom_call.1} parent=31 // pred_fallthru
          _
        %s204 = sand.u32 %s21, 1
        %s205 = scalar_lea.sflag [#allocation3], %s204
        %s206 = sand.u32 %s76, 1
        %s207 = smul.addr %s206, 8
        %s208 = scalar_lea.vmem [#allocation7], %s207
        // Predicated region
        $region41: #{tpu_custom_call.1} parent=31 // pred_check
          %p209 = pneg %p89
        $region42: #{tpu_custom_call.1} parent=31 // pred_check_branch
          %211 = sbr.rel (%p209) target = $region44
        $region43: #{tpu_custom_call.1} parent=31 // pred_region
          %212 = dma.done %s205, 128
        $region44: #{tpu_custom_call.1} parent=31 // pred_fallthru
          _
        %s213 = sand.u32 %s21, 1
        %s214 = scalar_lea.sflag [#allocation3], %s213
        %s215 = sand.u32 %s29, 1
        %s216 = smul.addr %s215, 40
        %s217 = scalar_lea.vmem [#allocation2], %s216
        %p218 = pneg %p42
        %p219 = pneg %p39
        %p220 = pneg %p63
        %p221 = pneg %p60
        %s222 = sand.u32 %s21, 1
        %s223 = scalar_lea.sflag [#allocation3], %s222
        %s224 = sand.u32 %s76, 1
        %s225 = smul.addr %s224, 8
        %s226 = scalar_lea.vmem [#allocation7], %s225
        %p227 = pneg %p89
        %p228 = pneg %p86
        %p229 = pneg %p115
        %p230 = pneg %p112
        %s231 = sand.u32 %s102, 1
        %s232 = scalar_lea.sflag [#allocation4], %s231
        %s233 = sand.u32 %s102, 1
        %s234 = smul.addr %s233, 8
        %s235 = scalar_lea.vmem [#allocation8], %s234
        %v236 = vld [vmem:[%s195] sm:$0xff]
        %v237 = vld [vmem:[%s195 + $0x8] sm:$0xff]
        %v238 = vld [vmem:[%s195 + $0x10] sm:$0xff]
        %v239 = vld [vmem:[%s195 + $0x18] sm:$0xff]
        %v240 = vld [vmem:[%s195 + $0x20] sm:$0xff]
        %v241 = vld [vmem:[#allocation5] sm:$0xff]
        %v242 = vld [vmem:[#allocation5 + $0x8] sm:$0xff]
        %v243 = vld [vmem:[#allocation5 + $0x10] sm:$0xff]
        %v244 = vld [vmem:[#allocation5 + $0x18] sm:$0xff]
        %v245 = vld [vmem:[#allocation5 + $0x20] sm:$0xff]
        %v246 = vld [vmem:[#allocation5 + $0x28] sm:$0xff]
        %v247 = vld [vmem:[#allocation5 + $0x30] sm:$0xff]
        %v248 = vld [vmem:[#allocation5 + $0x38] sm:$0xff]
        %v249 = vld [vmem:[#allocation5 + $0x40] sm:$0xff]
        %v250 = vld [vmem:[#allocation5 + $0x48] sm:$0xff]
        %v251 = vld [vmem:[#allocation5 + $0x50] sm:$0xff]
        %v252 = vld [vmem:[#allocation5 + $0x58] sm:$0xff]
        %v253 = vld [vmem:[#allocation5 + $0x60] sm:$0xff]
        %v254 = vld [vmem:[#allocation5 + $0x68] sm:$0xff]
        %v255 = vld [vmem:[#allocation5 + $0x70] sm:$0xff]
        %v256 = vld [vmem:[#allocation5 + $0x78] sm:$0xff]
        %v257 = vld [vmem:[#allocation5 + $0x80] sm:$0xff]
        %v258 = vld [vmem:[#allocation5 + $0x88] sm:$0xff]
        %v259 = vld [vmem:[#allocation5 + $0x90] sm:$0xff]
        %v260 = vld [vmem:[#allocation5 + $0x98] sm:$0xff]
        %v261 = vld [vmem:[#allocation5 + $0xa0] sm:$0xff]
        %v262 = vld [vmem:[#allocation5 + $0xa8] sm:$0xff]
        %v263 = vld [vmem:[#allocation5 + $0xb0] sm:$0xff]
        %v264 = vld [vmem:[#allocation5 + $0xb8] sm:$0xff]
        %v265 = vld [vmem:[#allocation5 + $0xc0] sm:$0xff]
        %v266 = vld [vmem:[#allocation5 + $0xc8] sm:$0xff]
        %v267 = vld [vmem:[#allocation5 + $0xd0] sm:$0xff]
        %v268 = vld [vmem:[#allocation5 + $0xd8] sm:$0xff]
        %v269 = vld [vmem:[#allocation5 + $0xe0] sm:$0xff]
        %v270 = vld [vmem:[#allocation5 + $0xe8] sm:$0xff]
        %v271 = vld [vmem:[#allocation5 + $0xf0] sm:$0xff]
        %v272 = vld [vmem:[#allocation5 + $0xf8] sm:$0xff]
        %v273 = vld [vmem:[#allocation5 + $0x100] sm:$0xff]
        %v274 = vld [vmem:[#allocation5 + $0x108] sm:$0xff]
        %v275 = vld [vmem:[#allocation5 + $0x110] sm:$0xff]
        %v276 = vld [vmem:[#allocation5 + $0x118] sm:$0xff]
        %v277 = vld [vmem:[#allocation5 + $0x120] sm:$0xff]
        %v278 = vld [vmem:[#allocation5 + $0x128] sm:$0xff]
        %v279 = vld [vmem:[#allocation5 + $0x130] sm:$0xff]
        %v280 = vld [vmem:[#allocation5 + $0x138] sm:$0xff]
        %v281 = vld [vmem:[#allocation5 + $0x140] sm:$0xff]
        %v282 = vld [vmem:[#allocation5 + $0x148] sm:$0xff]
        %v283 = vld [vmem:[#allocation5 + $0x150] sm:$0xff]
        %v284 = vld [vmem:[#allocation5 + $0x158] sm:$0xff]
        %v285 = vld [vmem:[#allocation5 + $0x160] sm:$0xff]
        %v286 = vld [vmem:[#allocation5 + $0x168] sm:$0xff]
        %v287 = vld [vmem:[#allocation5 + $0x170] sm:$0xff]
        %v288 = vld [vmem:[#allocation5 + $0x178] sm:$0xff]
        %v289 = vld [vmem:[#allocation5 + $0x180] sm:$0xff]
        %v290 = vld [vmem:[#allocation5 + $0x188] sm:$0xff]
        %v291 = vld [vmem:[#allocation5 + $0x190] sm:$0xff]
        %v292 = vld [vmem:[#allocation5 + $0x198] sm:$0xff]
        %v293 = vld [vmem:[#allocation5 + $0x1a0] sm:$0xff]
        %v294 = vld [vmem:[#allocation5 + $0x1a8] sm:$0xff]
        %v295 = vld [vmem:[#allocation5 + $0x1b0] sm:$0xff]
        %v296 = vld [vmem:[#allocation5 + $0x1b8] sm:$0xff]
        %v297 = vld [vmem:[#allocation5 + $0x1c0] sm:$0xff]
        %v298 = vld [vmem:[#allocation5 + $0x1c8] sm:$0xff]
        %v299 = vld [vmem:[#allocation5 + $0x1d0] sm:$0xff]
        %v300 = vld [vmem:[#allocation5 + $0x1d8] sm:$0xff]
        %v301 = vld [vmem:[#allocation5 + $0x1e0] sm:$0xff]
        %v302 = vld [vmem:[#allocation5 + $0x1e8] sm:$0xff]
        %v303 = vld [vmem:[#allocation5 + $0x1f0] sm:$0xff]
        %v304 = vld [vmem:[#allocation5 + $0x1f8] sm:$0xff]
        %v305 = vld [vmem:[#allocation5 + $0x200] sm:$0xff]
        %v306 = vld [vmem:[#allocation5 + $0x208] sm:$0xff]
        %v307 = vld [vmem:[#allocation5 + $0x210] sm:$0xff]
        %v308 = vld [vmem:[#allocation5 + $0x218] sm:$0xff]
        %v309 = vld [vmem:[#allocation5 + $0x220] sm:$0xff]
        %v310 = vld [vmem:[#allocation5 + $0x228] sm:$0xff]
        %v311 = vld [vmem:[#allocation5 + $0x230] sm:$0xff]
        %v312 = vld [vmem:[#allocation5 + $0x238] sm:$0xff]
        %v313 = vld [vmem:[#allocation5 + $0x240] sm:$0xff]
        %v314 = vld [vmem:[#allocation5 + $0x248] sm:$0xff]
        %v315 = vld [vmem:[#allocation5 + $0x250] sm:$0xff]
        %v316 = vld [vmem:[#allocation5 + $0x258] sm:$0xff]
        %v317 = vld [vmem:[#allocation5 + $0x260] sm:$0xff]
        %v318 = vld [vmem:[#allocation5 + $0x268] sm:$0xff]
        %v319 = vld [vmem:[#allocation5 + $0x270] sm:$0xff]
        %v320 = vld [vmem:[#allocation5 + $0x278] sm:$0xff]
        %v321 = vld [vmem:[%s208] sm:$0xff]
        %322 = vmatprep.subr.mxu0 0.0
        %323 = vmatpush1.msra.mxu0 %v241
        %324 = vmatprep.subr.mxu0 0.0
        %325 = vmatpush1.msra.mxu0 %v242
        %326 = vmatprep.subr.mxu0 0.0
        %327 = vmatpush1.msra.mxu0 %v243
        %328 = vmatprep.subr.mxu0 0.0
        %329 = vmatpush1.msra.mxu0 %v244
        %330 = vmatprep.subr.mxu0 0.0
        %331 = vmatpush1.msra.mxu0 %v245
        %332 = vmatprep.subr.mxu0 0.0
        %333 = vmatpush1.msra.mxu0 %v246
        %334 = vmatprep.subr.mxu0 0.0
        %335 = vmatpush1.msra.mxu0 %v247
        %336 = vmatprep.subr.mxu0 0.0
        %337 = vmatpush1.msra.mxu0 %v248
        %338 = vmatprep.subr.mxu0 0.0
        %339 = vmatpush1.msra.mxu0 %v249
        %340 = vmatprep.subr.mxu0 0.0
        %341 = vmatpush1.msra.mxu0 %v250
        %342 = vmatprep.subr.mxu0 0.0
        %343 = vmatpush1.msra.mxu0 %v251
        %344 = vmatprep.subr.mxu0 0.0
        %345 = vmatpush1.msra.mxu0 %v252
        %346 = vmatprep.subr.mxu0 0.0
        %347 = vmatpush1.msra.mxu0 %v253
        %348 = vmatprep.subr.mxu0 0.0
        %349 = vmatpush1.msra.mxu0 %v254
        %350 = vmatprep.subr.mxu0 0.0
        %351 = vmatpush1.msra.mxu0 %v255
        %352 = vmatprep.subr.mxu0 0.0
        %353 = vmatpush1.msra.mxu0 %v256
        %354 = vmatprep.subr.mxu0 0.0
        %355 = vmatpush1.msra.mxu0 %v257
        %356 = vmatprep.subr.mxu0 0.0
        %357 = vmatpush1.msra.mxu0 %v258
        %358 = vmatprep.subr.mxu0 0.0
        %359 = vmatpush1.msra.mxu0 %v259
        %360 = vmatprep.subr.mxu0 0.0
        %361 = vmatpush1.msra.mxu0 %v260
        %362 = vmatprep.subr.mxu0 0.0
        %363 = vmatpush1.msra.mxu0 %v261
        %364 = vmatprep.subr.mxu0 0.0
        %365 = vmatpush1.msra.mxu0 %v262
        %366 = vmatprep.subr.mxu0 0.0
        %367 = vmatpush1.msra.mxu0 %v263
        %368 = vmatprep.subr.mxu0 0.0
        %369 = vmatpush1.msra.mxu0 %v264
        %370 = vmatprep.subr.mxu0 0.0
        %371 = vmatpush1.msra.mxu0 %v265
        %372 = vmatprep.subr.mxu0 0.0
        %373 = vmatpush1.msra.mxu0 %v266
        %374 = vmatprep.subr.mxu0 0.0
        %375 = vmatpush1.msra.mxu0 %v267
        %376 = vmatprep.subr.mxu0 0.0
        %377 = vmatpush1.msra.mxu0 %v268
        %378 = vmatprep.subr.mxu0 0.0
        %379 = vmatpush1.msra.mxu0 %v269
        %380 = vmatprep.subr.mxu0 0.0
        %381 = vmatpush1.msra.mxu0 %v270
        %382 = vmatprep.subr.mxu0 0.0
        %383 = vmatpush1.msra.mxu0 %v271
        %384 = vmatprep.subr.mxu0 0.0
        %385 = vmatpush1.msra.mxu0 %v272
        %386 = vmatprep.mubr.f32.mxu0 %v237
        %387 = vmatmul.mubr.f32.gmra.mrb[0].mxu0 %v236
        %v388 = vpop.f32.mrb[0].mxu0
        %v389 = vadd.f32 %v321, %v388
        %v390 = vpop.f32.mrb[0].mxu0
        %391 = vdwg.mxu0
        %392 = vmatprep.subr.mxu0 0.0
        %393 = vmatpush1.msra.mxu0 %v273
        %394 = vmatprep.subr.mxu0 0.0
        %395 = vmatpush1.msra.mxu0 %v274
        %396 = vmatprep.subr.mxu0 0.0
        %397 = vmatpush1.msra.mxu0 %v275
        %398 = vmatprep.subr.mxu0 0.0
        %399 = vmatpush1.msra.mxu0 %v276
        %400 = vmatprep.subr.mxu0 0.0
        %401 = vmatpush1.msra.mxu0 %v277
        %402 = vmatprep.subr.mxu0 0.0
        %403 = vmatpush1.msra.mxu0 %v278
        %404 = vmatprep.subr.mxu0 0.0
        %405 = vmatpush1.msra.mxu0 %v279
        %406 = vmatprep.subr.mxu0 0.0
        %407 = vmatpush1.msra.mxu0 %v280
        %408 = vmatprep.subr.mxu0 0.0
        %409 = vmatpush1.msra.mxu0 %v281
        %410 = vmatprep.subr.mxu0 0.0
        %411 = vmatpush1.msra.mxu0 %v282
        %412 = vmatprep.subr.mxu0 0.0
        %413 = vmatpush1.msra.mxu0 %v283
        %414 = vmatprep.subr.mxu0 0.0
        %415 = vmatpush1.msra.mxu0 %v284
        %416 = vmatprep.subr.mxu0 0.0
        %417 = vmatpush1.msra.mxu0 %v285
        %418 = vmatprep.subr.mxu0 0.0
        %419 = vmatpush1.msra.mxu0 %v286
        %420 = vmatprep.subr.mxu0 0.0
        %421 = vmatpush1.msra.mxu0 %v287
        %422 = vmatprep.subr.mxu0 0.0
        %423 = vmatpush1.msra.mxu0 %v288
        %424 = vmatprep.subr.mxu0 0.0
        %425 = vmatpush1.msra.mxu0 %v289
        %426 = vmatprep.subr.mxu0 0.0
        %427 = vmatpush1.msra.mxu0 %v290
        %428 = vmatprep.subr.mxu0 0.0
        %429 = vmatpush1.msra.mxu0 %v291
        %430 = vmatprep.subr.mxu0 0.0
        %431 = vmatpush1.msra.mxu0 %v292
        %432 = vmatprep.subr.mxu0 0.0
        %433 = vmatpush1.msra.mxu0 %v293
        %434 = vmatprep.subr.mxu0 0.0
        %435 = vmatpush1.msra.mxu0 %v294
        %436 = vmatprep.subr.mxu0 0.0
        %437 = vmatpush1.msra.mxu0 %v295
        %438 = vmatprep.subr.mxu0 0.0
        %439 = vmatpush1.msra.mxu0 %v296
        %440 = vmatprep.subr.mxu0 0.0
        %441 = vmatpush1.msra.mxu0 %v297
        %442 = vmatprep.subr.mxu0 0.0
        %443 = vmatpush1.msra.mxu0 %v298
        %444 = vmatprep.subr.mxu0 0.0
        %445 = vmatpush1.msra.mxu0 %v299
        %446 = vmatprep.subr.mxu0 0.0
        %447 = vmatpush1.msra.mxu0 %v300
        %448 = vmatprep.subr.mxu0 0.0
        %449 = vmatpush1.msra.mxu0 %v301
        %450 = vmatprep.subr.mxu0 0.0
        %451 = vmatpush1.msra.mxu0 %v302
        %452 = vmatprep.subr.mxu0 0.0
        %453 = vmatpush1.msra.mxu0 %v303
        %454 = vmatprep.subr.mxu0 0.0
        %455 = vmatpush1.msra.mxu0 %v304
        %456 = vmatprep.mubr.f32.mxu0 %v239
        %457 = vmatmul.mubr.f32.gmra.mrb[0].mxu0 %v238
        %v458 = vpop.f32.mrb[0].mxu0
        %v459 = vadd.f32 %v389, %v458
        %v460 = vpop.f32.mrb[0].mxu0
        %461 = vdwg.mxu0
        %462 = vmatprep.subr.mxu0 0.0
        %463 = vmatpush1.msra.mxu0 %v305
        %464 = vmatprep.subr.mxu0 0.0
        %465 = vmatpush1.msra.mxu0 %v306
        %466 = vmatprep.subr.mxu0 0.0
        %467 = vmatpush1.msra.mxu0 %v307
        %468 = vmatprep.subr.mxu0 0.0
        %469 = vmatpush1.msra.mxu0 %v308
        %470 = vmatprep.subr.mxu0 0.0
        %471 = vmatpush1.msra.mxu0 %v309
        %472 = vmatprep.subr.mxu0 0.0
        %473 = vmatpush1.msra.mxu0 %v310
        %474 = vmatprep.subr.mxu0 0.0
        %475 = vmatpush1.msra.mxu0 %v311
        %476 = vmatprep.subr.mxu0 0.0
        %477 = vmatpush1.msra.mxu0 %v312
        %478 = vmatprep.subr.mxu0 0.0
        %479 = vmatpush1.msra.mxu0 %v313
        %480 = vmatprep.subr.mxu0 0.0
        %481 = vmatpush1.msra.mxu0 %v314
        %482 = vmatprep.subr.mxu0 0.0
        %483 = vmatpush1.msra.mxu0 %v315
        %484 = vmatprep.subr.mxu0 0.0
        %485 = vmatpush1.msra.mxu0 %v316
        %486 = vmatprep.subr.mxu0 0.0
        %487 = vmatpush1.msra.mxu0 %v317
        %488 = vmatprep.subr.mxu0 0.0
        %489 = vmatpush1.msra.mxu0 %v318
        %490 = vmatprep.subr.mxu0 0.0
        %491 = vmatpush1.msra.mxu0 %v319
        %492 = vmatprep.subr.mxu0 0.0
        %493 = vmatpush1.msra.mxu0 %v320
        %494 = vmatprep.subr.mxu0 0.0
        %495 = vmatpush1.msra.mxu0 0.0
        %496 = vmatprep.subr.mxu0 0.0
        %497 = vmatpush1.msra.mxu0 0.0
        %498 = vmatprep.subr.mxu0 0.0
        %499 = vmatpush1.msra.mxu0 0.0
        %500 = vmatprep.subr.mxu0 0.0
        %501 = vmatpush1.msra.mxu0 0.0
        %502 = vmatprep.subr.mxu0 0.0
        %503 = vmatpush1.msra.mxu0 0.0
        %504 = vmatprep.subr.mxu0 0.0
        %505 = vmatpush1.msra.mxu0 0.0
        %506 = vmatprep.subr.mxu0 0.0
        %507 = vmatpush1.msra.mxu0 0.0
        %508 = vmatprep.subr.mxu0 0.0
        %509 = vmatpush1.msra.mxu0 0.0
        %510 = vmatprep.subr.mxu0 0.0
        %511 = vmatpush1.msra.mxu0 0.0
        %512 = vmatprep.subr.mxu0 0.0
        %513 = vmatpush1.msra.mxu0 0.0
        %514 = vmatprep.subr.mxu0 0.0
        %515 = vmatpush1.msra.mxu0 0.0
        %516 = vmatprep.subr.mxu0 0.0
        %517 = vmatpush1.msra.mxu0 0.0
        %518 = vmatprep.subr.mxu0 0.0
        %519 = vmatpush1.msra.mxu0 0.0
        %520 = vmatprep.subr.mxu0 0.0
        %521 = vmatpush1.msra.mxu0 0.0
        %522 = vmatprep.subr.mxu0 0.0
        %523 = vmatpush1.msra.mxu0 0.0
        %524 = vmatprep.subr.mxu0 0.0
        %525 = vmatpush1.msra.mxu0 0.0
        %526 = vmatprep.mubr.f32.mxu0 0.0
        %527 = vmatmul.mubr.f32.gmra.mrb[0].mxu0 %v240
        %v528 = vpop.f32.mrb[0].mxu0
        %v529 = vadd.f32 %v459, %v528
        %v530 = vpop.f32.mrb[0].mxu0
        %531 = vdwg.mxu0
        %532 = vst [vmem:[%s235] sm:$0xff] %v529
        %s533 = sand.u32 %s102, 1
        %s534 = scalar_lea.sflag [#allocation4], %s533
        %s535 = sand.u32 %s102, 1
        %s536 = smul.addr %s535, 8
        %s537 = scalar_lea.vmem [#allocation8], %s536
        // Predicated region
        $region45: #{tpu_custom_call.1} parent=31 // pred_check
          %p538 = pneg %p112
        $region46: #{tpu_custom_call.1} parent=31 // pred_check_branch
          %540 = sbr.rel (%p538) target = $region48
        $region47: #{tpu_custom_call.1} parent=31 // pred_region
          %s542 = ssub.s32 128, 128
          %543 = vsyncadd %s534, %s542
          %s544 = smul.addr %s21, 128
          %s545 = scalar_lea.hbm %s3, %s544
          %s547 = sshll.u32 %s537, 4
          %s548 = int_to_ptr.vmem [resolvable:$true] %s547
          %550 = dma.vmem_to_hbm [thread:$0]  %s548, 128, %s545, %s534
        $region48: #{tpu_custom_call.1} parent=31 // pred_fallthru
          _
      $region32: #{tpu_custom_call.1} parent=5 // pred_fallthru
        _
      %p551 = scmp.le.s32.totalorder 2, %s16
      // Predicated region
      $region49: #{tpu_custom_call.1} parent=5 // pred_check
        %p552 = pneg %p551
      $region50: #{tpu_custom_call.1} parent=5 // pred_check_branch
        %554 = sbr.rel (%p552) target = $region52
      $region51: #{tpu_custom_call.1} parent=5 // pred_region
        %s555 = ssub.s32 %s16, 2
        // Predicated region
        $region53: #{tpu_custom_call.1} parent=51 // pred_check
          %p556 = pneg %p118
        $region54: #{tpu_custom_call.1} parent=51 // pred_check_branch
          %558 = sbr.rel (%p556) target = $region56
        $region55: #{tpu_custom_call.1} parent=51 // pred_region
          %s559 = sand.u32 %s103, 1
          %s560 = scalar_lea.sflag [#allocation4], %s559
          %s561 = sand.u32 %s103, 1
          %s562 = smul.addr %s561, 8
          %s563 = scalar_lea.vmem [#allocation8], %s562
          %564 = dma.done %s560, 128
        $region56: #{tpu_custom_call.1} parent=51 // pred_fallthru
          _
      $region52: #{tpu_custom_call.1} parent=5 // pred_fallthru
        _
    $region6: #{tpu_custom_call.1} parent=1 // loop_footer
      %s20 = sadd.s32 1, %s16
    $region7: #{tpu_custom_call.1} parent=1 // loop_footer_branch
      %15 = sbr.rel target = $region3
    $region8: #{tpu_custom_call.1} parent=1 // loop_exit
      _
    %565 = vsyncpa [#allocation3], 1
    %s566 = scalar_lea.sflag [#allocation3], 1
    %567 = vsyncpa %s566, 1
    %568 = vsyncpa [#allocation6], 1
    %569 = vsyncpa [#allocation4], 1
    %s570 = scalar_lea.sflag [#allocation4], 1
    %571 = vsyncpa %s570, 1

</llo_original>
